<compile_context>
chip_gen: v7x
topology: tpu7x:2x2x1
jax: 0.10.0
libtpu: 0.0.40
codegen_flags: <defaults>
</compile_context>

<pallas_src>
import functools

import jax
import jax.numpy as jnp
from jax.experimental import pallas as pl
from jax.experimental.pallas import tpu as pltpu


def _round_up(x, m):
    return ((x + m - 1) // m) * m


def _categorical_pi_kernel(x_ref, w1_ref, b1_ref, w2_ref, b2_ref, w3_ref, b3_ref,
                           act_ref, out_ref, *, act_dim):
    # ---- MLP: Linear -> tanh -> Linear -> tanh -> Linear (f32 accumulation) ----
    # First matmul consumes the bf16 streams directly (exact products, f32 accumulate).
    h1 = jnp.tanh(jnp.dot(x_ref[...], w1_ref[...],
                          preferred_element_type=jnp.float32) + b1_ref[...])
    # Activations stay f32 (v5e has no bf16 VPU/EUP path); weights upcast in-register.
    h2 = jnp.tanh(jnp.dot(h1, w2_ref[...].astype(jnp.float32),
                          preferred_element_type=jnp.float32) + b2_ref[...])
    logits = jnp.dot(h2, w3_ref[...].astype(jnp.float32),
                     preferred_element_type=jnp.float32) + b3_ref[...]
    # Padded head columns carry bias -1e30, so exp() underflows to exactly 0 there.

    # ---- numerically-stable softmax / log-softmax over the lane axis ----
    m = jnp.max(logits, axis=-1, keepdims=True)
    t = logits - m                                   # reused for exp and log-softmax
    e = jnp.exp(t)
    s = jnp.sum(e, axis=-1, keepdims=True)
    probs = e * pl.reciprocal(s, approx=True)        # EUP slot, free next to the exp
    log_probs = t - jnp.log(s)

    # ---- Categorical.log_prob(actions): NaN-safe where-select gather ----
    col = jax.lax.broadcasted_iota(jnp.int32, logits.shape, 1)
    actions = act_ref[...]                           # (TILE_B, 1) int32
    logp = jnp.sum(jnp.where(col == actions, log_probs, 0.0),
                   axis=-1, keepdims=True)           # (TILE_B, 1)

    # ---- lane-dense single slab: probs in cols [0, act_dim), logp in col act_dim ----
    out_ref[...] = jnp.where(col == act_dim, logp, probs).astype(out_ref.dtype)


def categorical_pi_forward(obs, actions, params, tile_b=1024):
    """Returns (probs, logp_a) matching CategoricalPi.forward(obs, actions)."""
    w1, b1, w2, b2, w3, b3 = params
    B, obs_dim = obs.shape
    hidden = w1.shape[1]
    act_dim = w3.shape[1]

    # Lane-dense head padding: act_dim (+1 spare column for logp) -> multiple of 128.
    act_pad = _round_up(act_dim + 1, 128)
    w3p = jnp.zeros((hidden, act_pad), w3.dtype).at[:, :act_dim].set(w3)
    b3p = jnp.full((1, act_pad), -1e30, jnp.float32).at[:, :act_dim].set(
        b3.reshape(1, act_dim))

    # bf16 HBM streams for obs + weights (halves bytes); biases / accumulation stay f32.
    obs_bf = obs.astype(jnp.bfloat16)
    w1_bf = w1.astype(jnp.bfloat16)
    w2_bf = w2.astype(jnp.bfloat16)
    w3p_bf = w3p.astype(jnp.bfloat16)
    b1_f = b1.reshape(1, hidden).astype(jnp.float32)
    b2_f = b2.reshape(1, hidden).astype(jnp.float32)

    # Batch tiling (sweep 512-2048 at real PPO batch sizes; shrink to fit tiny demos).
    tile_b = max(16, min(_round_up(int(tile_b), 16), _round_up(B, 16)))
    b_pad = _round_up(B, tile_b)
    actions_2d = actions.reshape(B, 1).astype(jnp.int32)
    if b_pad != B:
        obs_bf = jnp.pad(obs_bf, ((0, b_pad - B), (0, 0)))
        actions_2d = jnp.pad(actions_2d, ((0, b_pad - B), (0, 0)))

    row_map = lambda i: (i, 0)      # batch-tiled operands / output
    const_map = lambda i: (0, 0)    # weights & biases stay VMEM-resident across the grid

    slab = pl.pallas_call(
        functools.partial(_categorical_pi_kernel, act_dim=act_dim),
        out_shape=jax.ShapeDtypeStruct((b_pad, act_pad), jnp.float32),
        grid=(b_pad // tile_b,),
        in_specs=[
            pl.BlockSpec((tile_b, obs_dim), row_map),     # obs tile
            pl.BlockSpec((obs_dim, hidden), const_map),   # W1
            pl.BlockSpec((1, hidden), const_map),         # b1
            pl.BlockSpec((hidden, hidden), const_map),    # W2
            pl.BlockSpec((1, hidden), const_map),         # b2
            pl.BlockSpec((hidden, act_pad), const_map),   # W3 (padded)
            pl.BlockSpec((1, act_pad), const_map),        # b3 (padded with -1e30)
            pl.BlockSpec((tile_b, 1), row_map),           # actions
        ],
        out_specs=pl.BlockSpec((tile_b, act_pad), row_map),
        compiler_params=pltpu.CompilerParams(
            dimension_semantics=("parallel",),            # megacore sharding on v7x
            vmem_limit_bytes=32 * 1024 * 1024,            # safe headroom on every gen
        ),
    )(obs_bf, w1_bf, b1_f, w2_bf, b2_f, w3p_bf, b3p, actions_2d)

    probs = slab[:B, :act_dim]          # padded columns (exact zeros) sliced away
    logp_a = slab[:B, act_dim]          # packed logp column, shape (B,)
    return probs, logp_a


def init_params(key, obs_dim, act_dim, hidden=64):
    """Deterministic PyTorch-Linear-style (uniform) init. Weights stored (in, out)."""
    def linear(k, fan_in, fan_out):
        kw, kb = jax.random.split(k)
        bound = 1.0 / jnp.sqrt(fan_in)
        w = jax.random.uniform(kw, (fan_in, fan_out), jnp.float32, -bound, bound)
        b = jax.random.uniform(kb, (1, fan_out), jnp.float32, -bound, bound)
        return w, b

    k1, k2, k3 = jax.random.split(key, 3)
    w1, b1 = linear(k1, obs_dim, hidden)
    w2, b2 = linear(k2, hidden, hidden)
    w3, b3 = linear(k3, hidden, act_dim)
    return (w1, b1, w2, b2, w3, b3)


if __name__ == "__main__":
    key = jax.random.PRNGKey(0)
    k_obs, k_act, k_par = jax.random.split(key, 3)

    B, obs_dim, act_dim = 8, 32, 8
    obs = jax.random.normal(k_obs, (B, obs_dim), jnp.float32)
    actions = jax.random.randint(k_act, (B,), 0, act_dim, dtype=jnp.int32)
    params = init_params(k_par, obs_dim, act_dim)

    probs, logp_a = categorical_pi_forward(obs, actions, params)
    jax.block_until_ready((probs, logp_a))

    # Reference in plain JAX using the same bf16-rounded obs/weight streams, f32 math.
    w1, b1, w2, b2, w3, b3 = params
    f32 = lambda a: a.astype(jnp.bfloat16).astype(jnp.float32)
    h = jnp.tanh(f32(obs) @ f32(w1) + b1)
    h = jnp.tanh(h @ f32(w2) + b2)
    logits = h @ f32(w3) + b3
    ref_probs = jax.nn.softmax(logits, axis=-1)
    ref_logp = jax.nn.log_softmax(logits, axis=-1)[jnp.arange(B), actions]

    assert probs.shape == (B, act_dim) and logp_a.shape == (B,)
    assert jnp.allclose(probs, ref_probs, atol=2e-3)
    assert jnp.allclose(logp_a, ref_logp, atol=2e-3)
    assert jnp.allclose(jnp.sum(probs, axis=-1), 1.0, atol=2e-3)

    print("KERNEL_OK")
</pallas_src>

<mosaic_0001>
module attributes {stable_mosaic.version = 11 : i64} {
  func.func @_categorical_pi_kernel(%arg0: i32, %arg1: memref<16x32xbf16, #tpu.memory_space<vmem>>, %arg2: memref<32x64xbf16, #tpu.memory_space<vmem>>, %arg3: memref<1x64xf32, #tpu.memory_space<vmem>>, %arg4: memref<64x64xbf16, #tpu.memory_space<vmem>>, %arg5: memref<1x64xf32, #tpu.memory_space<vmem>>, %arg6: memref<64x128xbf16, #tpu.memory_space<vmem>>, %arg7: memref<1x128xf32, #tpu.memory_space<vmem>>, %arg8: memref<16x1xi32, #tpu.memory_space<vmem>>, %arg9: memref<16x128xf32, #tpu.memory_space<vmem>>) attributes {dimension_semantics = [#tpu.dimension_semantics<parallel>], iteration_bounds = array<i64: 1>, scalar_prefetch = 0 : i64, scratch_operands = 0 : i64, tpu.core_type = #tpu.core_type<tc>, window_params = [{transform_indices = @transform_0, window_bounds = array<i64: 16, 32>}, {pipeline_mode = #tpu.pipeline_mode<synchronous>, transform_indices = @transform_1, window_bounds = array<i64: 32, 64>}, {pipeline_mode = #tpu.pipeline_mode<synchronous>, transform_indices = @transform_2, window_bounds = array<i64: 1, 64>}, {pipeline_mode = #tpu.pipeline_mode<synchronous>, transform_indices = @transform_3, window_bounds = array<i64: 64, 64>}, {pipeline_mode = #tpu.pipeline_mode<synchronous>, transform_indices = @transform_4, window_bounds = array<i64: 1, 64>}, {pipeline_mode = #tpu.pipeline_mode<synchronous>, transform_indices = @transform_5, window_bounds = array<i64: 64, 128>}, {pipeline_mode = #tpu.pipeline_mode<synchronous>, transform_indices = @transform_6, window_bounds = array<i64: 1, 128>}, {transform_indices = @transform_7, window_bounds = array<i64: 16, 1>}, {transform_indices = @transform_8, window_bounds = array<i64: 16, 128>}]} {
    %c0 = arith.constant 0 : index
    %c0_0 = arith.constant 0 : index
    %0 = vector.load %arg1[%c0, %c0_0] : memref<16x32xbf16, #tpu.memory_space<vmem>>, vector<16x32xbf16>
    %c0_1 = arith.constant 0 : index
    %c0_2 = arith.constant 0 : index
    %1 = vector.load %arg2[%c0_1, %c0_2] : memref<32x64xbf16, #tpu.memory_space<vmem>>, vector<32x64xbf16>
    %cst = arith.constant dense<0.000000e+00> : vector<16x64xf32>
    %2 = tpu.matmul %0, %1, %cst {dimension_numbers = #tpu.dot_dimension_numbers<[1], [0], [0], [1], [0, 0, 1, 1], [], []>} : vector<16x32xbf16>, vector<32x64xbf16>, vector<16x64xf32> -> vector<16x64xf32>
    %c0_3 = arith.constant 0 : index
    %c0_4 = arith.constant 0 : index
    %3 = vector.load %arg3[%c0_3, %c0_4] : memref<1x64xf32, #tpu.memory_space<vmem>>, vector<1x64xf32>
    %4 = vector.broadcast %3 : vector<1x64xf32> to vector<16x64xf32>
    %5 = arith.addf %2, %4 : vector<16x64xf32>
    %6 = math.tanh %5 : vector<16x64xf32>
    %c0_5 = arith.constant 0 : index
    %c0_6 = arith.constant 0 : index
    %7 = vector.load %arg4[%c0_5, %c0_6] : memref<64x64xbf16, #tpu.memory_space<vmem>>, vector<64x64xbf16>
    %8 = arith.extf %7 : vector<64x64xbf16> to vector<64x64xf32>
    %cst_7 = arith.constant dense<0.000000e+00> : vector<16x64xf32>
    %9 = tpu.matmul %6, %8, %cst_7 {dimension_numbers = #tpu.dot_dimension_numbers<[1], [0], [0], [1], [0, 0, 1, 1], [], []>} : vector<16x64xf32>, vector<64x64xf32>, vector<16x64xf32> -> vector<16x64xf32>
    %c0_8 = arith.constant 0 : index
    %c0_9 = arith.constant 0 : index
    %10 = vector.load %arg5[%c0_8, %c0_9] : memref<1x64xf32, #tpu.memory_space<vmem>>, vector<1x64xf32>
    %11 = vector.broadcast %10 : vector<1x64xf32> to vector<16x64xf32>
    %12 = arith.addf %9, %11 : vector<16x64xf32>
    %13 = math.tanh %12 : vector<16x64xf32>
    %c0_10 = arith.constant 0 : index
    %c0_11 = arith.constant 0 : index
    %14 = vector.load %arg6[%c0_10, %c0_11] : memref<64x128xbf16, #tpu.memory_space<vmem>>, vector<64x128xbf16>
    %15 = arith.extf %14 : vector<64x128xbf16> to vector<64x128xf32>
    %cst_12 = arith.constant dense<0.000000e+00> : vector<16x128xf32>
    %16 = tpu.matmul %13, %15, %cst_12 {dimension_numbers = #tpu.dot_dimension_numbers<[1], [0], [0], [1], [0, 0, 1, 1], [], []>} : vector<16x64xf32>, vector<64x128xf32>, vector<16x128xf32> -> vector<16x128xf32>
    %c0_13 = arith.constant 0 : index
    %c0_14 = arith.constant 0 : index
    %17 = vector.load %arg7[%c0_13, %c0_14] : memref<1x128xf32, #tpu.memory_space<vmem>>, vector<1x128xf32>
    %18 = vector.broadcast %17 : vector<1x128xf32> to vector<16x128xf32>
    %19 = arith.addf %16, %18 : vector<16x128xf32>
    %cst_15 = arith.constant dense<0xFF800000> : vector<16xf32>
    %20 = vector.multi_reduction <maximumf>, %19, %cst_15 [1] : vector<16x128xf32> to vector<16xf32>
    %21 = vector.shape_cast %20 : vector<16xf32> to vector<16x1xf32>
    %22 = vector.broadcast %21 : vector<16x1xf32> to vector<16x128xf32>
    %23 = arith.subf %19, %22 : vector<16x128xf32>
    %24 = math.exp %23 : vector<16x128xf32>
    %cst_16 = arith.constant dense<0.000000e+00> : vector<16xf32>
    %25 = vector.multi_reduction <add>, %24, %cst_16 [1] : vector<16x128xf32> to vector<16xf32>
    %26 = vector.shape_cast %25 : vector<16xf32> to vector<16x1xf32>
    %27 = tpu.reciprocal %26 {approx = true} : vector<16x1xf32> -> vector<16x1xf32>
    %28 = vector.broadcast %27 : vector<16x1xf32> to vector<16x128xf32>
    %29 = arith.mulf %24, %28 : vector<16x128xf32>
    %30 = math.log %26 : vector<16x1xf32>
    %31 = vector.broadcast %30 : vector<16x1xf32> to vector<16x128xf32>
    %32 = arith.subf %23, %31 : vector<16x128xf32>
    %33 = tpu.iota {dimensions = array<i32: 1>} : vector<16x128xi32>
    %c0_17 = arith.constant 0 : index
    %c0_18 = arith.constant 0 : index
    %34 = vector.load %arg8[%c0_17, %c0_18] : memref<16x1xi32, #tpu.memory_space<vmem>>, vector<16x1xi32>
    %35 = vector.broadcast %34 : vector<16x1xi32> to vector<16x128xi32>
    %36 = arith.cmpi eq, %33, %35 : vector<16x128xi32>
    %cst_19 = arith.constant 0.000000e+00 : f32
    %37 = vector.broadcast %cst_19 : f32 to vector<16x128xf32>
    %38 = arith.select %36, %32, %37 : vector<16x128xi1>, vector<16x128xf32>
    %cst_20 = arith.constant dense<0.000000e+00> : vector<16xf32>
    %39 = vector.multi_reduction <add>, %38, %cst_20 [1] : vector<16x128xf32> to vector<16xf32>
    %40 = vector.shape_cast %39 : vector<16xf32> to vector<16x1xf32>
    %c8_i32 = arith.constant 8 : i32
    %41 = vector.broadcast %c8_i32 : i32 to vector<16x128xi32>
    %42 = arith.cmpi eq, %33, %41 : vector<16x128xi32>
    %43 = vector.shape_cast %40 : vector<16x1xf32> to vector<16x1xf32>
    %44 = vector.broadcast %43 : vector<16x1xf32> to vector<16x128xf32>
    %45 = arith.select %42, %44, %29 : vector<16x128xi1>, vector<16x128xf32>
    %c0_21 = arith.constant 0 : index
    %c0_22 = arith.constant 0 : index
    %46 = vector.load %arg9[%c0_21, %c0_22] : memref<16x128xf32, #tpu.memory_space<vmem>>, vector<16x128xf32>
    tpu.vector_store %arg9[%c0_21, %c0_22], %45 {strides = array<i32>} : memref<16x128xf32, #tpu.memory_space<vmem>>, vector<16x128xf32>,
    return
  }
  func.func @transform_0(%arg0: i32) -> (i32, i32) {
    %c0_i32 = arith.constant 0 : i32
    %c0_i32_0 = arith.constant 0 : i32
    return %arg0, %c0_i32 : i32, i32
  }
  func.func @transform_1(%arg0: i32) -> (i32, i32) {
    %c0_i32 = arith.constant 0 : i32
    %c0_i32_0 = arith.constant 0 : i32
    %c0_i32_1 = arith.constant 0 : i32
    return %c0_i32, %c0_i32_0 : i32, i32
  }
  func.func @transform_2(%arg0: i32) -> (i32, i32) {
    %c0_i32 = arith.constant 0 : i32
    %c0_i32_0 = arith.constant 0 : i32
    %c0_i32_1 = arith.constant 0 : i32
    return %c0_i32, %c0_i32_0 : i32, i32
  }
  func.func @transform_3(%arg0: i32) -> (i32, i32) {
    %c0_i32 = arith.constant 0 : i32
    %c0_i32_0 = arith.constant 0 : i32
    %c0_i32_1 = arith.constant 0 : i32
    return %c0_i32, %c0_i32_0 : i32, i32
  }
  func.func @transform_4(%arg0: i32) -> (i32, i32) {
    %c0_i32 = arith.constant 0 : i32
    %c0_i32_0 = arith.constant 0 : i32
    %c0_i32_1 = arith.constant 0 : i32
    return %c0_i32, %c0_i32_0 : i32, i32
  }
  func.func @transform_5(%arg0: i32) -> (i32, i32) {
    %c0_i32 = arith.constant 0 : i32
    %c0_i32_0 = arith.constant 0 : i32
    %c0_i32_1 = arith.constant 0 : i32
    return %c0_i32, %c0_i32_0 : i32, i32
  }
  func.func @transform_6(%arg0: i32) -> (i32, i32) {
    %c0_i32 = arith.constant 0 : i32
    %c0_i32_0 = arith.constant 0 : i32
    %c0_i32_1 = arith.constant 0 : i32
    return %c0_i32, %c0_i32_0 : i32, i32
  }
  func.func @transform_7(%arg0: i32) -> (i32, i32) {
    %c0_i32 = arith.constant 0 : i32
    %c0_i32_0 = arith.constant 0 : i32
    return %arg0, %c0_i32 : i32, i32
  }
  func.func @transform_8(%arg0: i32) -> (i32, i32) {
    %c0_i32 = arith.constant 0 : i32
    %c0_i32_0 = arith.constant 0 : i32
    return %arg0, %c0_i32 : i32, i32
  }
}

</mosaic_0001>

<llo_original>
// kernel: tpu_custom_call.1
$region0: #{tpu_custom_call.1}
  #allocation0 [shape = 'u32[]', space=smem, size = 0x4, offset = 0x4, fixed_abs, tag = 'smem constant byte address 0x4 - core index']
  #allocation1 [shape = 'u32[144,128]{1,0:T(1,128)}', space=vmem, size = 0x12000, scoped, tag = 'internal scratch']
  %s0 = inlined_call_operand.hbm [shape: bf16[16,32], index: 0, kind: input, shape index: {}]
  %s1 = inlined_call_operand.hbm [shape: bf16[32,64], index: 1, kind: input, shape index: {}]
  %s2 = inlined_call_operand.vmem [shape: f32[1,64], index: 2, kind: input, shape index: {}]
  %s3 = inlined_call_operand.hbm [shape: bf16[64,64], index: 3, kind: input, shape index: {}]
  %s4 = inlined_call_operand.vmem [shape: f32[1,64], index: 4, kind: input, shape index: {}]
  %s5 = inlined_call_operand.vmem [shape: bf16[64,128], index: 5, kind: input, shape index: {}]
  %s6 = inlined_call_operand.vmem [shape: f32[1,128], index: 6, kind: input, shape index: {}]
  %s7 = inlined_call_operand.vmem [shape: s32[16,1], index: 7, kind: input, shape index: {}]
  %s8 = inlined_call_operand.hbm [shape: f32[16,128], index: 8, kind: output, shape index: {}]
  %s9 = sld [smem:[#allocation0]]
  $region54: #{tpu_custom_call.1} parent=0
    _
  %s11 = ssub.s32 1, %s9
  %s12 = scalar_select 0, %s11, %s9
  $region1: #{tpu_custom_call.1} parent=0
    #allocation2 [shape = 'u8[4096]{0}', space=vmem, size = 0x1000, scoped, tag = 'input window, operand 0, single buffered']
    #allocation3 [shape = 's32[1]{0}', space=sflag, size = 0x4, scoped, tag = 'scoped memory for tpu_custom_call.1']
    #allocation4 [shape = 's32[1]{0}', space=sflag, size = 0x4, scoped, tag = 'scoped memory for tpu_custom_call.1']
    #allocation5 [shape = 'u8[8192]{0}', space=vmem, size = 0x2000, scoped, tag = 'input window, operand 1, single buffered']
    #allocation6 [shape = 's32[1]{0}', space=sflag, size = 0x4, scoped, tag = 'scoped memory for tpu_custom_call.1']
    #allocation7 [shape = 'u8[16384]{0}', space=vmem, size = 0x4000, scoped, tag = 'input window, operand 3, single buffered']
    #allocation8 [shape = 'u8[8192]{0}', space=vmem, size = 0x2000, scoped, tag = 'output window, operand 0, single buffered']
    %13 = vsyncpa [#allocation3], 0
    %14 = vsyncpa [#allocation6], 0
    %15 = vsyncpa [#allocation4], 0
    // Predicated region
    $region2: #{tpu_custom_call.1} parent=1 // pred_check
      _
    $region3: #{tpu_custom_call.1} parent=1 // pred_check_branch
      %17 = sbr.rel (0) target = $region5
    $region4: #{tpu_custom_call.1} parent=1 // pred_region
      %s19 = ssub.s32 128, 128
      %20 = vsyncadd [#allocation3], %s19
      %s21 = sshll.u32 [#allocation2], 4
      %s22 = int_to_ptr.vmem [resolvable:$true] %s21
      %27 = dma.hbm_to_vmem [thread:$0]  %s0, 128, %s22, [#allocation3], 64, 64, 4
    $region5: #{tpu_custom_call.1} parent=1 // pred_fallthru
      _
    // Predicated region
    $region6: #{tpu_custom_call.1} parent=1 // pred_check
      _
    $region7: #{tpu_custom_call.1} parent=1 // pred_check_branch
      %29 = sbr.rel (0) target = $region9
    $region8: #{tpu_custom_call.1} parent=1 // pred_region
      %s31 = ssub.s32 256, 256
      %32 = vsyncadd [#allocation6], %s31
      %s33 = sshll.u32 [#allocation5], 4
      %s34 = int_to_ptr.vmem [resolvable:$true] %s33
      %39 = dma.hbm_to_vmem [thread:$0]  %s1, 256, %s34, [#allocation6], 64, 64, 4
    $region9: #{tpu_custom_call.1} parent=1 // pred_fallthru
      _
    // Predicated region
    $region10: #{tpu_custom_call.1} parent=1 // pred_check
      _
    $region11: #{tpu_custom_call.1} parent=1 // pred_check_branch
      %41 = sbr.rel (0) target = $region13
    $region12: #{tpu_custom_call.1} parent=1 // pred_region
      _
    $region13: #{tpu_custom_call.1} parent=1 // pred_fallthru
      _
    // Predicated region
    $region14: #{tpu_custom_call.1} parent=1 // pred_check
      _
    $region15: #{tpu_custom_call.1} parent=1 // pred_check_branch
      %43 = sbr.rel (0) target = $region17
    $region16: #{tpu_custom_call.1} parent=1 // pred_region
      %s45 = ssub.s32 512, 512
      %46 = vsyncadd [#allocation6], %s45
      %s47 = sshll.u32 [#allocation7], 4
      %s48 = int_to_ptr.vmem [resolvable:$true] %s47
      %53 = dma.hbm_to_vmem [thread:$0]  %s3, 512, %s48, [#allocation6], 64, 64, 4
    $region17: #{tpu_custom_call.1} parent=1 // pred_fallthru
      _
    // Predicated region
    $region18: #{tpu_custom_call.1} parent=1 // pred_check
      _
    $region19: #{tpu_custom_call.1} parent=1 // pred_check_branch
      %55 = sbr.rel (0) target = $region21
    $region20: #{tpu_custom_call.1} parent=1 // pred_region
      _
    $region21: #{tpu_custom_call.1} parent=1 // pred_fallthru
      _
    // Predicated region
    $region22: #{tpu_custom_call.1} parent=1 // pred_check
      _
    $region23: #{tpu_custom_call.1} parent=1 // pred_check_branch
      %57 = sbr.rel (0) target = $region25
    $region24: #{tpu_custom_call.1} parent=1 // pred_region
      _
    $region25: #{tpu_custom_call.1} parent=1 // pred_fallthru
      _
    // Predicated region
    $region26: #{tpu_custom_call.1} parent=1 // pred_check
      _
    $region27: #{tpu_custom_call.1} parent=1 // pred_check_branch
      %59 = sbr.rel (0) target = $region29
    $region28: #{tpu_custom_call.1} parent=1 // pred_region
      _
    $region29: #{tpu_custom_call.1} parent=1 // pred_fallthru
      _
    // Predicated region
    $region30: #{tpu_custom_call.1} parent=1 // pred_check
      _
    $region31: #{tpu_custom_call.1} parent=1 // pred_check_branch
      %61 = sbr.rel (0) target = $region33
    $region32: #{tpu_custom_call.1} parent=1 // pred_region
      _
    $region33: #{tpu_custom_call.1} parent=1 // pred_fallthru
      _
    // Predicated region
    $region34: #{tpu_custom_call.1} parent=1 // pred_check
      _
    $region35: #{tpu_custom_call.1} parent=1 // pred_check_branch
      %63 = sbr.rel (0) target = $region37
    $region36: #{tpu_custom_call.1} parent=1 // pred_region
      %64 = dma.done [#allocation3], 128
    $region37: #{tpu_custom_call.1} parent=1 // pred_fallthru
      _
    // Predicated region
    $region38: #{tpu_custom_call.1} parent=1 // pred_check
      _
    $region39: #{tpu_custom_call.1} parent=1 // pred_check_branch
      %66 = sbr.rel (0) target = $region41
    $region40: #{tpu_custom_call.1} parent=1 // pred_region
      %67 = dma.done [#allocation6], 256
    $region41: #{tpu_custom_call.1} parent=1 // pred_fallthru
      _
    // Predicated region
    $region42: #{tpu_custom_call.1} parent=1 // pred_check
      _
    $region43: #{tpu_custom_call.1} parent=1 // pred_check_branch
      %69 = sbr.rel (0) target = $region45
    $region44: #{tpu_custom_call.1} parent=1 // pred_region
      %70 = dma.done [#allocation6], 512
    $region45: #{tpu_custom_call.1} parent=1 // pred_fallthru
      _
    %v72 = vld [vmem:[#allocation2] sm:$0xf]
    %v73 = vld [vmem:[#allocation2 + $0x4] sm:$0xf]
    %v74 = vld [vmem:[#allocation5] sm:$0xf]
    %v75 = vld [vmem:[#allocation5 + $0x4] sm:$0xf]
    %v76 = vld [vmem:[#allocation5 + $0x8] sm:$0xf]
    %v77 = vld [vmem:[#allocation5 + $0xc] sm:$0xf]
    %v78 = vld [vmem:[%s2] sm:$0x1]
    %v80 = vlaneseq
    %v81 = vshrl.u32 %v80, 7
    %v82 = vsub.s32 0, %v81
    %v83 = vrot.slane %v78, %v82
    %v87 = vunpack.c.l.b16 %v72
    %v88 = vunpack.c.l.b16 %v73
    %v89 = vpack.c.b16 %v88, %v87
    %v94 = vunpack.c.l.b16 %v74
    %v95 = vunpack.c.l.b16 %v75
    %v96 = vunpack.c.l.b16 %v76
    %v97 = vunpack.c.l.b16 %v77
    %v98 = vpack.c.b16 %v95, %v94
    %v99 = vpack.c.b16 %v97, %v96
    %vm102 = vcmask 261120
    %v104 = vsel %vm102, %v89, 0
    %106 = vmatprep.subr.bf16.mxu0 0
    %107 = vmatpush1.bf16.msra.mxu0 %v98
    %108 = vmatprep.subr.bf16.mxu0 0
    %109 = vmatpush1.bf16.msra.mxu0 %v99
    %110 = vmatprep.subr.bf16.mxu0 0
    %111 = vmatpush1.bf16.msra.mxu0 0
    %112 = vmatprep.subr.bf16.mxu0 0
    %113 = vmatpush1.bf16.msra.mxu0 0
    %114 = vmatprep.subr.bf16.mxu0 0
    %115 = vmatpush1.bf16.msra.mxu0 0
    %116 = vmatprep.subr.bf16.mxu0 0
    %117 = vmatpush1.bf16.msra.mxu0 0
    %118 = vmatprep.subr.bf16.mxu0 0
    %119 = vmatpush1.bf16.msra.mxu0 0
    %120 = vmatprep.subr.bf16.mxu0 0
    %121 = vmatpush1.bf16.msra.mxu0 0
    %122 = vmatprep.subr.bf16.mxu0 0
    %123 = vmatpush1.bf16.msra.mxu0 0
    %124 = vmatprep.subr.bf16.mxu0 0
    %125 = vmatpush1.bf16.msra.mxu0 0
    %126 = vmatprep.subr.bf16.mxu0 0
    %127 = vmatpush1.bf16.msra.mxu0 0
    %128 = vmatprep.subr.bf16.mxu0 0
    %129 = vmatpush1.bf16.msra.mxu0 0
    %130 = vmatprep.subr.bf16.mxu0 0
    %131 = vmatpush1.bf16.msra.mxu0 0
    %132 = vmatprep.subr.bf16.mxu0 0
    %133 = vmatpush1.bf16.msra.mxu0 0
    %134 = vmatprep.subr.bf16.mxu0 0
    %135 = vmatpush1.bf16.msra.mxu0 0
    %136 = vmatprep.subr.bf16.mxu0 0
    %137 = vmatpush1.bf16.msra.mxu0 0
    %138 = vmatprep.mubr.bf16.mxu0 0
    %139 = vmatmul.mubr.bf16.gmra.mrb[0].mxu0 %v104
    %v140 = vpop.f32.mrb[0].mxu0
    %v141 = vadd.f32 %v83, %v140
    %v142 = vpop.f32.mrb[0].mxu0
    %v143 = vpop.f32.mrb[0].mxu0
    %v144 = vadd.f32 %v83, %v143
    %v145 = vpop.f32.mrb[0].mxu0
    %146 = vdwg.mxu0
    %v147 = vtanh.pop %v141
    %v148 = vtanh.pop %v144
    %v149 = vld [vmem:[#allocation7] sm:$0xf]
    %v150 = vld [vmem:[#allocation7 + $0x4] sm:$0xf]
    %v151 = vld [vmem:[#allocation7 + $0x8] sm:$0xf]
    %v152 = vld [vmem:[#allocation7 + $0xc] sm:$0xf]
    %v153 = vld [vmem:[#allocation7 + $0x10] sm:$0xf]
    %v154 = vld [vmem:[#allocation7 + $0x14] sm:$0xf]
    %v155 = vld [vmem:[#allocation7 + $0x18] sm:$0xf]
    %v156 = vld [vmem:[#allocation7 + $0x1c] sm:$0xf]
    %v157 = vunpack.c.l.bf16 %v149
    %v158 = vunpack.c.l.bf16 %v150
    %v159 = vunpack.c.l.bf16 %v151
    %v160 = vunpack.c.l.bf16 %v152
    %v161 = vunpack.c.l.bf16 %v153
    %v162 = vunpack.c.l.bf16 %v154
    %v163 = vunpack.c.l.bf16 %v155
    %v164 = vunpack.c.l.bf16 %v156
    %v165 = vld [vmem:[%s4] sm:$0x1]
    %v167 = vlaneseq
    %v168 = vshrl.u32 %v167, 7
    %v169 = vsub.s32 0, %v168
    %v170 = vrot.slane %v165, %v169
    %vm172 = vcmask 523264
    %v174 = vsel %vm172, %v147, 0
    %v177 = vsel %vm172, %v148, 0
    %179 = vmatprep.subr.mxu0 0.0
    %180 = vmatpush1.msra.mxu0 %v157
    %181 = vmatprep.subr.mxu0 0.0
    %182 = vmatpush1.msra.mxu0 %v158
    %183 = vmatprep.subr.mxu0 0.0
    %184 = vmatpush1.msra.mxu0 %v159
    %185 = vmatprep.subr.mxu0 0.0
    %186 = vmatpush1.msra.mxu0 %v160
    %187 = vmatprep.subr.mxu0 0.0
    %188 = vmatpush1.msra.mxu0 %v161
    %189 = vmatprep.subr.mxu0 0.0
    %190 = vmatpush1.msra.mxu0 %v162
    %191 = vmatprep.subr.mxu0 0.0
    %192 = vmatpush1.msra.mxu0 %v163
    %193 = vmatprep.subr.mxu0 0.0
    %194 = vmatpush1.msra.mxu0 %v164
    %195 = vmatprep.subr.mxu0 0.0
    %196 = vmatpush1.msra.mxu0 0.0
    %197 = vmatprep.subr.mxu0 0.0
    %198 = vmatpush1.msra.mxu0 0.0
    %199 = vmatprep.subr.mxu0 0.0
    %200 = vmatpush1.msra.mxu0 0.0
    %201 = vmatprep.subr.mxu0 0.0
    %202 = vmatpush1.msra.mxu0 0.0
    %203 = vmatprep.subr.mxu0 0.0
    %204 = vmatpush1.msra.mxu0 0.0
    %205 = vmatprep.subr.mxu0 0.0
    %206 = vmatpush1.msra.mxu0 0.0
    %207 = vmatprep.subr.mxu0 0.0
    %208 = vmatpush1.msra.mxu0 0.0
    %209 = vmatprep.subr.mxu0 0.0
    %210 = vmatpush1.msra.mxu0 0.0
    %211 = vmatprep.subr.mxu0 0.0
    %212 = vmatpush1.msra.mxu0 0.0
    %213 = vmatprep.subr.mxu0 0.0
    %214 = vmatpush1.msra.mxu0 0.0
    %215 = vmatprep.subr.mxu0 0.0
    %216 = vmatpush1.msra.mxu0 0.0
    %217 = vmatprep.subr.mxu0 0.0
    %218 = vmatpush1.msra.mxu0 0.0
    %219 = vmatprep.subr.mxu0 0.0
    %220 = vmatpush1.msra.mxu0 0.0
    %221 = vmatprep.subr.mxu0 0.0
    %222 = vmatpush1.msra.mxu0 0.0
    %223 = vmatprep.subr.mxu0 0.0
    %224 = vmatpush1.msra.mxu0 0.0
    %225 = vmatprep.subr.mxu0 0.0
    %226 = vmatpush1.msra.mxu0 0.0
    %227 = vmatprep.subr.mxu0 0.0
    %228 = vmatpush1.msra.mxu0 0.0
    %229 = vmatprep.subr.mxu0 0.0
    %230 = vmatpush1.msra.mxu0 0.0
    %231 = vmatprep.subr.mxu0 0.0
    %232 = vmatpush1.msra.mxu0 0.0
    %233 = vmatprep.subr.mxu0 0.0
    %234 = vmatpush1.msra.mxu0 0.0
    %235 = vmatprep.subr.mxu0 0.0
    %236 = vmatpush1.msra.mxu0 0.0
    %237 = vmatprep.subr.mxu0 0.0
    %238 = vmatpush1.msra.mxu0 0.0
    %239 = vmatprep.subr.mxu0 0.0
    %240 = vmatpush1.msra.mxu0 0.0
    %241 = vmatprep.subr.mxu0 0.0
    %242 = vmatpush1.msra.mxu0 0.0
    %243 = vmatprep.mubr.f32.mxu0 0.0
    %244 = vmatmul.mubr.f32.gmra.mrb[0].mxu0 %v174
    %v245 = vpop.f32.mrb[0].mxu0
    %v246 = vadd.f32 %v170, %v245
    %v247 = vpop.f32.mrb[0].mxu0
    %248 = vmatprep.mubr.f32.mxu0 0.0
    %249 = vmatmul.mubr.f32.gmra.mrb[0].mxu0 %v177
    %v250 = vpop.f32.mrb[0].mxu0
    %v251 = vadd.f32 %v170, %v250
    %v252 = vpop.f32.mrb[0].mxu0
    %253 = vdwg.mxu0
    %v254 = vtanh.pop %v246
    %v255 = vtanh.pop %v251
    %v256 = vld [vmem:[%s5] sm:$0xf]
    %v257 = vld [vmem:[%s5 + $0x4] sm:$0xf]
    %v258 = vld [vmem:[%s5 + $0x8] sm:$0xf]
    %v259 = vld [vmem:[%s5 + $0xc] sm:$0xf]
    %v260 = vld [vmem:[%s5 + $0x10] sm:$0xf]
    %v261 = vld [vmem:[%s5 + $0x14] sm:$0xf]
    %v262 = vld [vmem:[%s5 + $0x18] sm:$0xf]
    %v263 = vld [vmem:[%s5 + $0x1c] sm:$0xf]
    %v264 = vunpack.c.l.bf16 %v256
    %v265 = vunpack.c.l.bf16 %v257
    %v266 = vunpack.c.l.bf16 %v258
    %v267 = vunpack.c.l.bf16 %v259
    %v268 = vunpack.c.l.bf16 %v260
    %v269 = vunpack.c.l.bf16 %v261
    %v270 = vunpack.c.l.bf16 %v262
    %v271 = vunpack.c.l.bf16 %v263
    %v272 = vld [vmem:[%s6] sm:$0x1]
    %v274 = vlaneseq
    %v275 = vshrl.u32 %v274, 7
    %v276 = vsub.s32 0, %v275
    %v277 = vrot.slane %v272, %v276
    %v280 = vsel %vm172, %v254, 0
    %v283 = vsel %vm172, %v255, 0
    %285 = vmatprep.subr.mxu0 0.0
    %286 = vmatpush1.msra.mxu0 %v264
    %287 = vmatprep.subr.mxu0 0.0
    %288 = vmatpush1.msra.mxu0 %v265
    %289 = vmatprep.subr.mxu0 0.0
    %290 = vmatpush1.msra.mxu0 %v266
    %291 = vmatprep.subr.mxu0 0.0
    %292 = vmatpush1.msra.mxu0 %v267
    %293 = vmatprep.subr.mxu0 0.0
    %294 = vmatpush1.msra.mxu0 %v268
    %295 = vmatprep.subr.mxu0 0.0
    %296 = vmatpush1.msra.mxu0 %v269
    %297 = vmatprep.subr.mxu0 0.0
    %298 = vmatpush1.msra.mxu0 %v270
    %299 = vmatprep.subr.mxu0 0.0
    %300 = vmatpush1.msra.mxu0 %v271
    %301 = vmatprep.subr.mxu0 0.0
    %302 = vmatpush1.msra.mxu0 0.0
    %303 = vmatprep.subr.mxu0 0.0
    %304 = vmatpush1.msra.mxu0 0.0
    %305 = vmatprep.subr.mxu0 0.0
    %306 = vmatpush1.msra.mxu0 0.0
    %307 = vmatprep.subr.mxu0 0.0
    %308 = vmatpush1.msra.mxu0 0.0
    %309 = vmatprep.subr.mxu0 0.0
    %310 = vmatpush1.msra.mxu0 0.0
    %311 = vmatprep.subr.mxu0 0.0
    %312 = vmatpush1.msra.mxu0 0.0
    %313 = vmatprep.subr.mxu0 0.0
    %314 = vmatpush1.msra.mxu0 0.0
    %315 = vmatprep.subr.mxu0 0.0
    %316 = vmatpush1.msra.mxu0 0.0
    %317 = vmatprep.subr.mxu0 0.0
    %318 = vmatpush1.msra.mxu0 0.0
    %319 = vmatprep.subr.mxu0 0.0
    %320 = vmatpush1.msra.mxu0 0.0
    %321 = vmatprep.subr.mxu0 0.0
    %322 = vmatpush1.msra.mxu0 0.0
    %323 = vmatprep.subr.mxu0 0.0
    %324 = vmatpush1.msra.mxu0 0.0
    %325 = vmatprep.subr.mxu0 0.0
    %326 = vmatpush1.msra.mxu0 0.0
    %327 = vmatprep.subr.mxu0 0.0
    %328 = vmatpush1.msra.mxu0 0.0
    %329 = vmatprep.subr.mxu0 0.0
    %330 = vmatpush1.msra.mxu0 0.0
    %331 = vmatprep.subr.mxu0 0.0
    %332 = vmatpush1.msra.mxu0 0.0
    %333 = vmatprep.subr.mxu0 0.0
    %334 = vmatpush1.msra.mxu0 0.0
    %335 = vmatprep.subr.mxu0 0.0
    %336 = vmatpush1.msra.mxu0 0.0
    %337 = vmatprep.subr.mxu0 0.0
    %338 = vmatpush1.msra.mxu0 0.0
    %339 = vmatprep.subr.mxu0 0.0
    %340 = vmatpush1.msra.mxu0 0.0
    %341 = vmatprep.subr.mxu0 0.0
    %342 = vmatpush1.msra.mxu0 0.0
    %343 = vmatprep.subr.mxu0 0.0
    %344 = vmatpush1.msra.mxu0 0.0
    %345 = vmatprep.subr.mxu0 0.0
    %346 = vmatpush1.msra.mxu0 0.0
    %347 = vmatprep.subr.mxu0 0.0
    %348 = vmatpush1.msra.mxu0 0.0
    %349 = vmatprep.mubr.f32.mxu0 0.0
    %350 = vmatmul.mubr.f32.gmra.mrb[0].mxu0 %v280
    %v351 = vpop.f32.mrb[0].mxu0
    %v352 = vadd.f32 %v277, %v351
    %v353 = vpop.f32.mrb[0].mxu0
    %354 = vmatprep.mubr.f32.mxu0 0.0
    %355 = vmatmul.mubr.f32.gmra.mrb[0].mxu0 %v283
    %v356 = vpop.f32.mrb[0].mxu0
    %v357 = vadd.f32 %v277, %v356
    %v358 = vpop.f32.mrb[0].mxu0
    %359 = vdwg.mxu0
    %360 = vmax.xlane.f32.xlu0 %v352
    %v361 = vpop.xlane.xlu0 %360
    %362 = vmax.xlane.f32.xlu0 %v357
    %v363 = vpop.xlane.xlu0 %362
    %v364 = vsub.f32 %v352, %v361
    %v365 = vsub.f32 %v357, %v363
    %v366 = vmul.f32 %v364, 1.442695
    %v367 = vpow.pop %v366
    %v368 = vmul.f32 %v365, 1.442695
    %v369 = vpow.pop %v368
    %370 = vadd.xlane.f32.xlu0 %v367
    %v371 = vpop.xlane.xlu0 %370
    %372 = vadd.xlane.f32.xlu0 %v369
    %v373 = vpop.xlane.xlu0 %372
    %v374 = vrcp.pop %v371
    %v375 = vrcp.pop %v373
    %v376 = vmul.f32 %v367, %v374
    %v377 = vmul.f32 %v369, %v375
    %v378 = vlog2.pop %v371
    %v379 = vmul.f32 %v378, 0.6931472
    %v380 = vlog2.pop %v373
    %v381 = vmul.f32 %v380, 0.6931472
    %v382 = vsub.f32 %v364, %v379
    %v383 = vsub.f32 %v365, %v381
    %v384 = vlaneseq
    %v385 = vand.u32 %v384, 127
    %v386 = vld [vmem:[%s7] sm:$0xff]
    %v387 = vld [vmem:[%s7 + $0x8] sm:$0xff]
    %388 = vset.pattern.permute.xlu0 0
    %389 = vperm.xlu0 %388, %v386
    %v390 = vpop.permute.xlu0 %389
    %391 = vset.pattern.permute.xlu0 0
    %392 = vperm.xlu0 %391, %v387
    %v393 = vpop.permute.xlu0 %392
    %vm394 = vcmp.eq.s32.totalorder %v385, %v390
    %vm395 = vcmp.eq.s32.totalorder %v385, %v393
    %v396 = vsel %vm394, %v382, 0.0
    %v397 = vsel %vm395, %v383, 0.0
    %398 = vadd.xlane.f32.xlu0 %v396
    %v399 = vpop.xlane.xlu0 %398
    %400 = vadd.xlane.f32.xlu0 %v397
    %v401 = vpop.xlane.xlu0 %400
    %vm402 = vcmp.eq.s32.totalorder %v385, 8
    %v403 = vsel %vm402, %v399, %v376
    %v404 = vsel %vm402, %v401, %v377
    %405 = vst [vmem:[#allocation8] sm:$0xff] %v403
    %406 = vst [vmem:[#allocation8 + $0x8] sm:$0xff] %v404
    // Predicated region
    $region46: #{tpu_custom_call.1} parent=1 // pred_check
      _
    $region47: #{tpu_custom_call.1} parent=1 // pred_check_branch
      %408 = sbr.rel (0) target = $region49
    $region48: #{tpu_custom_call.1} parent=1 // pred_region
      %s410 = ssub.s32 256, 256
      %411 = vsyncadd [#allocation4], %s410
      %s412 = sshll.u32 [#allocation8], 4
      %s413 = int_to_ptr.vmem [resolvable:$true] %s412
      %418 = dma.vmem_to_hbm [thread:$0]  %s413, 256, %s8, [#allocation4], 128, 128, 8
    $region49: #{tpu_custom_call.1} parent=1 // pred_fallthru
      _
    // Predicated region
    $region50: #{tpu_custom_call.1} parent=1 // pred_check
      _
    $region51: #{tpu_custom_call.1} parent=1 // pred_check_branch
      %420 = sbr.rel (0) target = $region53
    $region52: #{tpu_custom_call.1} parent=1 // pred_region
      %421 = dma.done [#allocation4], 256
    $region53: #{tpu_custom_call.1} parent=1 // pred_fallthru
      _
    %422 = vsyncpa [#allocation3], 1
    %423 = vsyncpa [#allocation6], 1
    %424 = vsyncpa [#allocation4], 1

</llo_original>
